<compile_context>
chip_gen: v6e
topology: v6e:2x2x1
jax: 0.10.0
libtpu: 0.0.40
codegen_flags: <defaults>
</compile_context>

<pallas_src>
import functools

import jax
import jax.numpy as jnp
from jax.experimental import pallas as pl
from jax.experimental.pallas import tpu as pltpu


def _round_up(a: int, b: int) -> int:
    return ((a + b - 1) // b) * b


def spiking_neuron_kernel(x_ref, w_ref, o_ref, acc_ref):
    """One (tm, tn) output tile; accumulates over the K grid axis."""
    k = pl.program_id(2)

    @pl.when(k == 0)
    def _():
        acc_ref[...] = jnp.zeros_like(acc_ref)

    # Hot path: MXU matmul with f32 accumulation.
    acc_ref[...] += jnp.dot(
        x_ref[...], w_ref[...], preferred_element_type=jnp.float32
    )

    @pl.when(k == pl.num_programs(2) - 1)
    def _():
        # Surrogate gradient epilogue: sigmoid(alpha * (pre - 1)), alpha = 10.
        alpha = 10.0
        o_ref[...] = jax.nn.sigmoid(alpha * (acc_ref[...] - 1.0)).astype(o_ref.dtype)


@functools.partial(jax.jit, static_argnames=("tm", "tn", "tk"))
def spiking_neuron_layer(x, w, *, tm=256, tn=256, tk=512):
    """x: [B, size_in] f32, w: [size_in, size_out] f32 -> [B, size_out] f32."""
    B, K = x.shape
    K_w, N = w.shape
    assert K == K_w, "x feature dim must match W's first dim"

    # Shrink tiles for small problems while keeping (8, 128) alignment.
    tm = min(tm, _round_up(B, 8))
    tn = min(tn, _round_up(N, 128))
    tk = min(tk, _round_up(K, 128))

    Mp = _round_up(B, tm)
    Kp = _round_up(K, tk)
    Np = _round_up(N, tn)

    # Zero-padding K is mathematically exact; padded M rows / N cols are
    # computed (cheap) and sliced off at the end.
    x_p = x if (Mp, Kp) == (B, K) else jnp.pad(x, ((0, Mp - B), (0, Kp - K)))
    w_p = w if (Kp, Np) == (K, N) else jnp.pad(w, ((0, Kp - K), (0, Np - N)))

    grid = (Mp // tm, Np // tn, Kp // tk)

    out_padded = pl.pallas_call(
        spiking_neuron_kernel,
        out_shape=jax.ShapeDtypeStruct((Mp, Np), jnp.float32),
        grid_spec=pltpu.PrefetchScalarGridSpec(
            num_scalar_prefetch=0,
            grid=grid,
            in_specs=[
                pl.BlockSpec((tm, tk), lambda i, j, k: (i, k)),
                pl.BlockSpec((tk, tn), lambda i, j, k: (k, j)),
            ],
            out_specs=pl.BlockSpec((tm, tn), lambda i, j, k: (i, j)),
            scratch_shapes=[pltpu.VMEM((tm, tn), jnp.float32)],
        ),
        compiler_params=pltpu.CompilerParams(
            dimension_semantics=("parallel", "parallel", "arbitrary"),
            # Double-buffered (tm,tk)+(tk,tn)+(tm,tn) f32 blocks are ~3 MiB at
            # the default tile caps; 32 MiB leaves ample headroom on every
            # generation (v7x scoped default is 32 MiB of 64 MiB physical).
            vmem_limit_bytes=32 * 1024 * 1024,
        ),
    )(x_p, w_p)

    return out_padded[:B, :N]


def _reference(x, w):
    return jax.nn.sigmoid(10.0 * (x @ w - 1.0))


if __name__ == "__main__":
    key = jax.random.PRNGKey(0)

    # --- Small shapes consistent with the module (single grid tile path) ---
    batch, size_in, size_out = 8, 32, 64
    kx, kw, key = (*jax.random.split(key, 2), key)
    x = jax.random.normal(kx, (batch, size_in), dtype=jnp.float32)
    # Mirrors torch.randn(size_in, size_out) * 0.01
    synaptic_weights = (
        jax.random.normal(kw, (size_in, size_out), dtype=jnp.float32) * 0.01
    )

    out = jax.block_until_ready(spiking_neuron_layer(x, synaptic_weights))
    ref = _reference(x, synaptic_weights)
    assert out.shape == (batch, size_out)
    assert jnp.allclose(out, ref, atol=1e-5, rtol=1e-5)

    # --- Multi-tile path: exercises the (M, N, K) grid + K accumulation ---
    kb, kx2, kw2 = jax.random.split(jax.random.PRNGKey(1), 3)
    B2, K2, N2 = 512, 1024, 384  # grid = (2, 2, 2) with default tile caps
    x2 = jax.random.normal(kx2, (B2, K2), dtype=jnp.float32)
    w2 = jax.random.normal(kw2, (K2, N2), dtype=jnp.float32) * 0.01
    out2 = jax.block_until_ready(spiking_neuron_layer(x2, w2))
    ref2 = _reference(x2, w2)
    assert out2.shape == (B2, N2)
    assert jnp.allclose(out2, ref2, atol=1e-4, rtol=1e-4)

    print("KERNEL_OK")
</pallas_src>

<mosaic_0001>
module attributes {stable_mosaic.version = 11 : i64} {
  func.func @spiking_neuron_kernel(%arg0: i32, %arg1: i32, %arg2: i32, %arg3: memref<8x128xf32, #tpu.memory_space<vmem>>, %arg4: memref<128x128xf32, #tpu.memory_space<vmem>>, %arg5: memref<8x128xf32, #tpu.memory_space<vmem>>, %arg6: memref<8x128xf32, #tpu.memory_space<vmem>>) attributes {dimension_semantics = [#tpu.dimension_semantics<parallel>, #tpu.dimension_semantics<parallel>, #tpu.dimension_semantics<arbitrary>], iteration_bounds = array<i64: 1, 1, 1>, scalar_prefetch = 0 : i64, scratch_operands = 1 : i64, tpu.core_type = #tpu.core_type<tc>, window_params = [{transform_indices = @transform_0, window_bounds = array<i64: 8, 128>}, {transform_indices = @transform_1, window_bounds = array<i64: 128, 128>}, {transform_indices = @transform_2, window_bounds = array<i64: 8, 128>}]} {
    %c0_i32 = arith.constant 0 : i32
    %0 = arith.cmpi eq, %arg2, %c0_i32 : i32
    %1 = arith.extui %0 : i1 to i32
    %c0_i32_0 = arith.constant 0 : i32
    %2 = arith.cmpi ne, %1, %c0_i32_0 : i32
    scf.if %2 {
      %cst_10 = arith.constant 0.000000e+00 : f32
      %12 = vector.broadcast %cst_10 : f32 to vector<8x128xf32>
      %c0_11 = arith.constant 0 : index
      %c0_12 = arith.constant 0 : index
      %13 = vector.load %arg6[%c0_11, %c0_12] : memref<8x128xf32, #tpu.memory_space<vmem>>, vector<8x128xf32>
      tpu.vector_store %arg6[%c0_11, %c0_12], %12 {strides = array<i32>} : memref<8x128xf32, #tpu.memory_space<vmem>>, vector<8x128xf32>,
    } else {
    }
    %c0 = arith.constant 0 : index
    %c0_1 = arith.constant 0 : index
    %3 = vector.load %arg6[%c0, %c0_1] : memref<8x128xf32, #tpu.memory_space<vmem>>, vector<8x128xf32>
    %c0_2 = arith.constant 0 : index
    %c0_3 = arith.constant 0 : index
    %4 = vector.load %arg3[%c0_2, %c0_3] : memref<8x128xf32, #tpu.memory_space<vmem>>, vector<8x128xf32>
    %c0_4 = arith.constant 0 : index
    %c0_5 = arith.constant 0 : index
    %5 = vector.load %arg4[%c0_4, %c0_5] : memref<128x128xf32, #tpu.memory_space<vmem>>, vector<128x128xf32>
    %cst = arith.constant dense<0.000000e+00> : vector<8x128xf32>
    %6 = tpu.matmul %4, %5, %cst {dimension_numbers = #tpu.dot_dimension_numbers<[1], [0], [0], [1], [0, 0, 1, 1], [], []>} : vector<8x128xf32>, vector<128x128xf32>, vector<8x128xf32> -> vector<8x128xf32>
    %7 = arith.addf %3, %6 : vector<8x128xf32>
    %c0_6 = arith.constant 0 : index
    %c0_7 = arith.constant 0 : index
    %8 = vector.load %arg6[%c0_6, %c0_7] : memref<8x128xf32, #tpu.memory_space<vmem>>, vector<8x128xf32>
    tpu.vector_store %arg6[%c0_6, %c0_7], %7 {strides = array<i32>} : memref<8x128xf32, #tpu.memory_space<vmem>>, vector<8x128xf32>,
    %c0_i32_8 = arith.constant 0 : i32
    %9 = arith.cmpi eq, %arg2, %c0_i32_8 : i32
    %10 = arith.extui %9 : i1 to i32
    %c0_i32_9 = arith.constant 0 : i32
    %11 = arith.cmpi ne, %10, %c0_i32_9 : i32
    scf.if %11 {
      %c0_10 = arith.constant 0 : index
      %c0_11 = arith.constant 0 : index
      %12 = vector.load %arg6[%c0_10, %c0_11] : memref<8x128xf32, #tpu.memory_space<vmem>>, vector<8x128xf32>
      %cst_12 = arith.constant 1.000000e+00 : f32
      %13 = vector.broadcast %cst_12 : f32 to vector<8x128xf32>
      %14 = arith.subf %12, %13 : vector<8x128xf32>
      %cst_13 = arith.constant 1.000000e+01 : f32
      %15 = vector.broadcast %cst_13 : f32 to vector<8x128xf32>
      %16 = arith.mulf %15, %14 : vector<8x128xf32>
      %17 = arith.negf %16 : vector<8x128xf32>
      %18 = math.exp %17 : vector<8x128xf32>
      %cst_14 = arith.constant 1.000000e+00 : f32
      %19 = vector.broadcast %cst_14 : f32 to vector<8x128xf32>
      %20 = arith.addf %19, %18 : vector<8x128xf32>
      %21 = arith.divf %19, %20 : vector<8x128xf32>
      %c0_15 = arith.constant 0 : index
      %c0_16 = arith.constant 0 : index
      %22 = vector.load %arg5[%c0_15, %c0_16] : memref<8x128xf32, #tpu.memory_space<vmem>>, vector<8x128xf32>
      tpu.vector_store %arg5[%c0_15, %c0_16], %21 {strides = array<i32>} : memref<8x128xf32, #tpu.memory_space<vmem>>, vector<8x128xf32>,
    } else {
    }
    return
  }
  func.func @transform_0(%arg0: i32, %arg1: i32, %arg2: i32) -> (i32, i32) {
    %c0_i32 = arith.constant 0 : i32
    return %arg0, %arg2 : i32, i32
  }
  func.func @transform_1(%arg0: i32, %arg1: i32, %arg2: i32) -> (i32, i32) {
    %c0_i32 = arith.constant 0 : i32
    return %arg2, %arg1 : i32, i32
  }
  func.func @transform_2(%arg0: i32, %arg1: i32, %arg2: i32) -> (i32, i32) {
    %c0_i32 = arith.constant 0 : i32
    return %arg0, %arg1 : i32, i32
  }
}

</mosaic_0001>

<llo_original>
// kernel: spiking_neuron_layer.1
$region0: #{spiking_neuron_layer.1}
  #allocation0 [shape = 'u32[]', space=smem, size = 0x4, offset = 0x4, fixed_abs, tag = 'smem constant byte address 0x4 - core index']
  #allocation1 [shape = 'u32[144,128]{1,0:T(1,128)}', space=vmem, size = 0x12000, scoped, tag = 'internal scratch']
  #allocation2 [shape = 'f32[8,128]{1,0:T(8,128)}', space=vmem, size = 0x1000, scoped, tag = 'scratch operand']
  %s0 = inlined_call_operand.vmem [shape: f32[8,128], index: 0, kind: input, shape index: {}]
  %s1 = inlined_call_operand.vmem [shape: f32[128,128], index: 1, kind: input, shape index: {}]
  %s2 = inlined_call_operand.hbm [shape: f32[8,128], index: 2, kind: output, shape index: {}]
  %s3 = sld [smem:[#allocation0]]
  $region26: #{spiking_neuron_layer.1} parent=0
    _
  %s5 = ssub.s32 1, %s3
  %s6 = scalar_select 0, %s5, %s3
  $region1: #{spiking_neuron_layer.1} parent=0
    #allocation3 [shape = 'u8[4096]{0}', space=vmem, size = 0x1000, scoped, tag = 'output window, operand 0, single buffered']
    #allocation4 [shape = 's32[1]{0}', space=sflag, size = 0x4, scoped, tag = 'scoped memory for spiking_neuron_layer.1']
    %7 = vsyncpa [#allocation4], 0
    // Predicated region
    $region2: #{spiking_neuron_layer.1} parent=1 // pred_check
      _
    $region3: #{spiking_neuron_layer.1} parent=1 // pred_check_branch
      %9 = sbr.rel (0) target = $region5
    $region4: #{spiking_neuron_layer.1} parent=1 // pred_region
      _
    $region5: #{spiking_neuron_layer.1} parent=1 // pred_fallthru
      _
    // Predicated region
    $region6: #{spiking_neuron_layer.1} parent=1 // pred_check
      _
    $region7: #{spiking_neuron_layer.1} parent=1 // pred_check_branch
      %11 = sbr.rel (0) target = $region9
    $region8: #{spiking_neuron_layer.1} parent=1 // pred_region
      _
    $region9: #{spiking_neuron_layer.1} parent=1 // pred_fallthru
      _
    %p12 = scmp.eq.s32.totalorder 0, 0
    // Predicated region
    $region10: #{spiking_neuron_layer.1} parent=1 // pred_check
      %p13 = pneg %p12
    $region11: #{spiking_neuron_layer.1} parent=1 // pred_check_branch
      %15 = sbr.rel (%p13) target = $region13
    $region12: #{spiking_neuron_layer.1} parent=1 // pred_region
      %16 = vst [vmem:[#allocation2] sm:$0xff] 0.0
    $region13: #{spiking_neuron_layer.1} parent=1 // pred_fallthru
      _
    %v17 = vld [vmem:[#allocation2] sm:$0xff]
    %v18 = vld [vmem:[%s0] sm:$0xff]
    %v19 = vld [vmem:[%s1] sm:$0xff]
    %v20 = vld [vmem:[%s1 + $0x8] sm:$0xff]
    %v21 = vld [vmem:[%s1 + $0x10] sm:$0xff]
    %v22 = vld [vmem:[%s1 + $0x18] sm:$0xff]
    %v23 = vld [vmem:[%s1 + $0x20] sm:$0xff]
    %v24 = vld [vmem:[%s1 + $0x28] sm:$0xff]
    %v25 = vld [vmem:[%s1 + $0x30] sm:$0xff]
    %v26 = vld [vmem:[%s1 + $0x38] sm:$0xff]
    %v27 = vld [vmem:[%s1 + $0x40] sm:$0xff]
    %v28 = vld [vmem:[%s1 + $0x48] sm:$0xff]
    %v29 = vld [vmem:[%s1 + $0x50] sm:$0xff]
    %v30 = vld [vmem:[%s1 + $0x58] sm:$0xff]
    %v31 = vld [vmem:[%s1 + $0x60] sm:$0xff]
    %v32 = vld [vmem:[%s1 + $0x68] sm:$0xff]
    %v33 = vld [vmem:[%s1 + $0x70] sm:$0xff]
    %v34 = vld [vmem:[%s1 + $0x78] sm:$0xff]
    %35 = vmatprep.subr.mxu0 0.0
    %36 = vmatpush1.msra.mxu0 %v34
    %37 = vmatprep.subr.mxu0 0.0
    %38 = vmatpush1.msra.mxu0 %v33
    %39 = vmatprep.subr.mxu0 0.0
    %40 = vmatpush1.msra.mxu0 %v32
    %41 = vmatprep.subr.mxu0 0.0
    %42 = vmatpush1.msra.mxu0 %v31
    %43 = vmatprep.subr.mxu0 0.0
    %44 = vmatpush1.msra.mxu0 %v30
    %45 = vmatprep.subr.mxu0 0.0
    %46 = vmatpush1.msra.mxu0 %v29
    %47 = vmatprep.subr.mxu0 0.0
    %48 = vmatpush1.msra.mxu0 %v28
    %49 = vmatprep.subr.mxu0 0.0
    %50 = vmatpush1.msra.mxu0 %v27
    %51 = vmatprep.subr.mxu0 0.0
    %52 = vmatpush1.msra.mxu0 %v26
    %53 = vmatprep.subr.mxu0 0.0
    %54 = vmatpush1.msra.mxu0 %v25
    %55 = vmatprep.subr.mxu0 0.0
    %56 = vmatpush1.msra.mxu0 %v24
    %57 = vmatprep.subr.mxu0 0.0
    %58 = vmatpush1.msra.mxu0 %v23
    %59 = vmatprep.subr.mxu0 0.0
    %60 = vmatpush1.msra.mxu0 %v22
    %61 = vmatprep.subr.mxu0 0.0
    %62 = vmatpush1.msra.mxu0 %v21
    %63 = vmatprep.subr.mxu0 0.0
    %64 = vmatpush1.msra.mxu0 %v20
    %65 = vmatprep.subr.mxu0 0.0
    %66 = vmatpush1.msra.mxu0 %v19
    %67 = vmatprep.subr.mxu0 0.0
    %68 = vmatpush2.msra.mxu0 0.0
    %69 = vmatprep.subr.mxu0 0.0
    %70 = vmatpush2.msra.mxu0 0.0
    %71 = vmatprep.subr.mxu0 0.0
    %72 = vmatpush2.msra.mxu0 0.0
    %73 = vmatprep.subr.mxu0 0.0
    %74 = vmatpush2.msra.mxu0 0.0
    %75 = vmatprep.subr.mxu0 0.0
    %76 = vmatpush2.msra.mxu0 0.0
    %77 = vmatprep.subr.mxu0 0.0
    %78 = vmatpush2.msra.mxu0 0.0
    %79 = vmatprep.subr.mxu0 0.0
    %80 = vmatpush2.msra.mxu0 0.0
    %81 = vmatprep.subr.mxu0 0.0
    %82 = vmatpush2.msra.mxu0 0.0
    %83 = vmatprep.subr.mxu0 0.0
    %84 = vmatpush2.msra.mxu0 0.0
    %85 = vmatprep.subr.mxu0 0.0
    %86 = vmatpush2.msra.mxu0 0.0
    %87 = vmatprep.subr.mxu0 0.0
    %88 = vmatpush2.msra.mxu0 0.0
    %89 = vmatprep.subr.mxu0 0.0
    %90 = vmatpush2.msra.mxu0 0.0
    %91 = vmatprep.subr.mxu0 0.0
    %92 = vmatpush2.msra.mxu0 0.0
    %93 = vmatprep.subr.mxu0 0.0
    %94 = vmatpush2.msra.mxu0 0.0
    %95 = vmatprep.subr.mxu0 0.0
    %96 = vmatpush2.msra.mxu0 0.0
    %97 = vmatprep.subr.mxu0 0.0
    %98 = vmatpush2.msra.mxu0 0.0
    %99 = vmatprep.mubr.f32.mxu0 0.0
    %100 = vmatmul.mubr.f32.gmra.mxu0 %v18
    %v101 = vpop.f32.mrf.mxu0
    %v102 = vadd.f32 0.0, %v101
    %v103 = vpop.f32.mrf.mxu0
    %104 = vdwg.mxu0
    %v105 = vadd.f32 %v17, %v102
    %106 = vst [vmem:[#allocation2] sm:$0xff] %v105
    // Predicated region
    $region14: #{spiking_neuron_layer.1} parent=1 // pred_check
      %p107 = pneg %p12
    $region15: #{spiking_neuron_layer.1} parent=1 // pred_check_branch
      %109 = sbr.rel (%p107) target = $region17
    $region16: #{spiking_neuron_layer.1} parent=1 // pred_region
      %v110 = vld [vmem:[#allocation2] sm:$0xff]
      %v111 = vsub.f32 %v110, 1.0
      %v112 = vmul.f32 %v111, 10.0
      %v113 = vxor.u32 %v112, 2147483648
      %v114 = vmul.f32 %v113, 1.442695
      %v115 = vpow.pop %v114
      %v116 = vadd.f32 %v115, 1.0
      %v117 = vrcp.pop %v116
      %v118 = vmul.f32 1.0, %v117
      %119 = vst [vmem:[#allocation3] sm:$0xff] %v118
    $region17: #{spiking_neuron_layer.1} parent=1 // pred_fallthru
      _
    // Predicated region
    $region18: #{spiking_neuron_layer.1} parent=1 // pred_check
      _
    $region19: #{spiking_neuron_layer.1} parent=1 // pred_check_branch
      %121 = sbr.rel (0) target = $region21
    $region20: #{spiking_neuron_layer.1} parent=1 // pred_region
      %s123 = ssub.s32 128, 128
      %124 = vsyncadd [#allocation4], %s123
      %s126 = sshll.u32 [#allocation3], 4
      %s127 = int_to_ptr.vmem [resolvable:$true] %s126
      %129 = dma.vmem_to_hbm [thread:$0]  %s127, 128, %s2, [#allocation4]
    $region21: #{spiking_neuron_layer.1} parent=1 // pred_fallthru
      _
    // Predicated region
    $region22: #{spiking_neuron_layer.1} parent=1 // pred_check
      _
    $region23: #{spiking_neuron_layer.1} parent=1 // pred_check_branch
      %131 = sbr.rel (0) target = $region25
    $region24: #{spiking_neuron_layer.1} parent=1 // pred_region
      %132 = dma.done [#allocation4], 128
    $region25: #{spiking_neuron_layer.1} parent=1 // pred_fallthru
      _
    %133 = vsyncpa [#allocation4], 1

</llo_original>
